<compile_context>
chip_gen: v6e
topology: v6e:2x2x1
jax: 0.10.0
libtpu: 0.0.40
codegen_flags: <defaults>
</compile_context>

<pallas_src>
import functools

import jax
import jax.numpy as jnp
import numpy as np
from jax.experimental import pallas as pl
from jax.experimental.pallas import tpu as pltpu


def _round_up(x, m):
    return ((x + m - 1) // m) * m


def _device_kind():
    try:
        return jax.devices()[0].device_kind.lower()
    except Exception:
        return ""


def _choose_block_b(batch):
    """Per-generation batch-tile sizing.

    v5e/v6e have one TensorCore -> a single grid step minimizes per-step
    overhead on this latency-bound kernel.  v7x has two TensorCores -> keep at
    least two parallel batch tiles so the second core gets work.
    """
    kind = _device_kind()
    bp8 = _round_up(max(batch, 1), 8)
    if ("v7" in kind or "7x" in kind) and bp8 >= 16:
        return min(512, _round_up(pl.cdiv(bp8, 2), 8))
    return min(1024, bp8)


def _choose_out_dtype():
    """bf16 epilogue/output on v6e/v7x (bf16 VPU/EUP); f32 on v5e/unknown."""
    kind = _device_kind()
    if "v6" in kind or "v7" in kind or "7x" in kind:
        return jnp.bfloat16
    return jnp.float32


def _vae_kernel(
    x_ref, eps_ref,
    w1e_ref, b1e_ref,      # encoder.linear1          : (F, H)   bf16, (1, H)    f32
    wme_ref, bme_ref,      # fused mu|log_sigma head  : (H, 2Lp) bf16, (1, 2Lp)  f32
    w1d_ref, b1d_ref,      # decoder.linear1          : (Lp, H)  bf16, (1, H)    f32
    w2d_ref, b2d_ref,      # decoder.linear2          : (H, F)   bf16, (1, F)    f32
    out_ref,
    z_scr,                 # (bb, Lp) f32 VMEM scratch for the lane-padded latent
):
    """Full VAE forward for one batch tile.

    Encoder: h = relu(x @ W1e + b1e);  [mu | log_sigma] = h @ Wme + bme
    Reparam: z = mu + exp(log_sigma) * eps   (eps ~ N(0,1), sampled outside)
    Decoder: hd = relu(z @ W1d + b1d); recon = sigmoid(hd @ W2d + b2d)
    """
    x = x_ref[...]                          # (bb, F) f32 (bf16 accepted too)
    lp = z_scr.shape[1]                     # lane-padded latent dim (128)

    # ---- encoder (bf16 MXU operands, f32 accumulate) ----
    h = jnp.dot(x.astype(jnp.bfloat16), w1e_ref[...],
                preferred_element_type=jnp.float32) + b1e_ref[...]
    h = jnp.maximum(h, 0.0)

    # fused mu / log_sigma projection: one (bb, H) @ (H, 2*Lp) matmul
    ms = jnp.dot(h.astype(jnp.bfloat16), wme_ref[...],
                 preferred_element_type=jnp.float32) + bme_ref[...]
    mu = ms[:, :lp]                         # (bb, Lp); lanes >= L are exactly 0

    # ---- reparameterization, only on the L live latent lanes ----
    eps = eps_ref[...]                      # (bb, L), unpadded
    l = eps.shape[1]
    sigma = jnp.exp(ms[:, lp:lp + l])       # exp restricted to live lanes, f32
    z_scr[...] = mu                         # padded lanes stay 0 (inert in decoder)
    z_scr[:, :l] = mu[:, :l] + sigma * eps
    z = z_scr[...]                          # (bb, Lp)

    # ---- decoder (padded rows of w1d are zero -> padded z lanes inert) ----
    hd = jnp.dot(z.astype(jnp.bfloat16), w1d_ref[...],
                 preferred_element_type=jnp.float32) + b1d_ref[...]
    hd = jnp.maximum(hd, 0.0)
    logits = jnp.dot(hd.astype(jnp.bfloat16), w2d_ref[...],
                     preferred_element_type=jnp.float32) + b2d_ref[...]
    # Epilogue in the output dtype: bf16 on v6e/v7x, f32 on v5e.
    out_ref[...] = jax.nn.sigmoid(logits.astype(out_ref.dtype))

    # TODO(synk): the PyTorch encoder also stashes self.kl as a side effect;
    # VariationalAutoencoder.forward only returns the reconstruction, so the
    # KL scalar is not emitted here (mu/sigma would need to be extra outputs).


@functools.partial(jax.jit, static_argnames=("block_b", "out_dtype"))
def _vae_forward_impl(x, eps, packed, *, block_b, out_dtype):
    B, F = x.shape
    L = eps.shape[1]
    Lp = packed["w1d"].shape[0]          # lane-padded latent dim (multiple of 128)
    H = packed["w1e"].shape[1]
    assert block_b % 8 == 0 and L <= Lp

    bb = min(block_b, _round_up(B, 8))   # batch tile (multiple of 8 sublanes)
    Bp = _round_up(B, bb)

    # Guard padding so an already-aligned batch pays nothing.  eps keeps its
    # true latent width (padded to Lp inside the kernel, not via HBM).
    if Bp != B:
        x = jnp.pad(x, ((0, Bp - B), (0, 0)))
        eps = jnp.pad(eps, ((0, Bp - B), (0, 0)))

    def batch_spec(cols):
        return pl.BlockSpec((bb, cols), lambda i: (i, 0))

    def full_spec(rows, cols):
        # Grid-invariant operands: constant index_map -> not re-fetched per step.
        return pl.BlockSpec((rows, cols), lambda i: (0, 0))

    grid_spec = pltpu.PrefetchScalarGridSpec(
        num_scalar_prefetch=0,
        grid=(Bp // bb,),
        in_specs=[
            batch_spec(F),            # x
            batch_spec(L),            # eps (full-extent last dim, no lane pad)
            full_spec(F, H),          # w1e
            full_spec(1, H),          # b1e
            full_spec(H, 2 * Lp),     # wme (fused, latent-padded mu|log_sigma)
            full_spec(1, 2 * Lp),     # bme
            full_spec(Lp, H),         # w1d (padded rows are zero)
            full_spec(1, H),          # b1d
            full_spec(H, F),          # w2d
            full_spec(1, F),          # b2d
        ],
        out_specs=batch_spec(F),
        scratch_shapes=[pltpu.VMEM((bb, Lp), jnp.float32)],
    )

    out = pl.pallas_call(
        _vae_kernel,
        out_shape=jax.ShapeDtypeStruct((Bp, F), out_dtype),
        grid_spec=grid_spec,
        compiler_params=pltpu.CompilerParams(
            dimension_semantics=("parallel",),   # batch tiles shard across TCs (v7x)
            vmem_limit_bytes=32 * 1024 * 1024,   # ample at these shapes; lower block_b for huge F
        ),
    )(
        x, eps,
        packed["w1e"], packed["b1e"],
        packed["wme"], packed["bme"],
        packed["w1d"], packed["b1d"],
        packed["w2d"], packed["b2d"],
    )
    if Bp != B:
        out = out[:B]
    return out


def vae_forward(x, eps, packed, *, block_b=None, out_dtype=None):
    """x: (B, ...) any trailing shape (flattened like torch.flatten(start_dim=1));
    eps: (B, L) standard-normal; packed: pack_params() output."""
    x = x.reshape(x.shape[0], -1)
    if block_b is None:
        block_b = _choose_block_b(x.shape[0])
    if out_dtype is None:
        out_dtype = _choose_out_dtype()
    return _vae_forward_impl(x, eps, packed, block_b=block_b, out_dtype=out_dtype)


def init_params(key, latent_dims, num_features, hidden_features):
    """nn.Linear-style init (uniform +-1/sqrt(fan_in)).

    Weights are stored already transposed: (in_features, out_features).
    Biases are (1, out_features). All f32, unpadded (reference layout).
    """
    ks = jax.random.split(key, 10)

    def lin(kw, kb, fan_in, fan_out):
        bound = 1.0 / np.sqrt(fan_in)
        w = jax.random.uniform(kw, (fan_in, fan_out), jnp.float32, -bound, bound)
        b = jax.random.uniform(kb, (1, fan_out), jnp.float32, -bound, bound)
        return w, b

    w1e, b1e = lin(ks[0], ks[1], num_features, hidden_features)   # encoder.linear1
    w2e, b2e = lin(ks[2], ks[3], hidden_features, latent_dims)    # encoder.linear2 (mu)
    w3e, b3e = lin(ks[4], ks[5], hidden_features, latent_dims)    # encoder.linear3 (log sigma)
    w1d, b1d = lin(ks[6], ks[7], latent_dims, hidden_features)    # decoder.linear1
    w2d, b2d = lin(ks[8], ks[9], hidden_features, num_features)   # decoder.linear2
    return dict(w1e=w1e, b1e=b1e, w2e=w2e, b2e=b2e, w3e=w3e, b3e=b3e,
                w1d=w1d, b1d=b1d, w2d=w2d, b2d=b2d)


def pack_params(p, latent_pad=128):
    """Kernel-side parameter packing:
      * pad latent dim L -> Lp (lane-dense multiple of 128) with zeros; padded
        rows of w1d are zero so padded z lanes never contribute,
      * fuse mu / log_sigma heads into one (H, 2*Lp) weight,
      * store matmul weights in bf16 (MXU operands); biases stay f32.
    """
    L = p["w2e"].shape[1]
    Lp = max(latent_pad, _round_up(L, 128))

    def padc(a):  # pad output columns L -> Lp with zeros
        return jnp.pad(a, ((0, 0), (0, Lp - L)))

    wme = jnp.concatenate([padc(p["w2e"]), padc(p["w3e"])], axis=1)   # (H, 2*Lp)
    bme = jnp.concatenate([padc(p["b2e"]), padc(p["b3e"])], axis=1)   # (1, 2*Lp)
    w1d = jnp.pad(p["w1d"], ((0, Lp - L), (0, 0)))                    # (Lp, H)

    bf16 = lambda a: a.astype(jnp.bfloat16)
    return dict(
        w1e=bf16(p["w1e"]), b1e=p["b1e"],
        wme=bf16(wme),      bme=bme,
        w1d=bf16(w1d),      b1d=p["b1d"],
        w2d=bf16(p["w2d"]), b2d=p["b2d"],
    )


def vae_forward_ref(x, eps, p):
    """Pure-JAX reference on the original (unpadded, unfused) params, using the
    same bf16-operand / f32-accumulate matmul convention as the kernel."""
    def mm(a, w):
        return jnp.dot(a.astype(jnp.bfloat16), w.astype(jnp.bfloat16),
                       preferred_element_type=jnp.float32)
    h = jnp.maximum(mm(x, p["w1e"]) + p["b1e"], 0.0)
    mu = mm(h, p["w2e"]) + p["b2e"]
    sigma = jnp.exp(mm(h, p["w3e"]) + p["b3e"])
    z = mu + sigma * eps
    hd = jnp.maximum(mm(z, p["w1d"]) + p["b1d"], 0.0)
    return jax.nn.sigmoid(mm(hd, p["w2d"]) + p["b2d"])


if __name__ == "__main__":
    # Small shapes consistent with the module: NCHW input flattened to (B, F).
    batch, channels, height, width = 2, 4, 16, 16
    num_features = channels * height * width      # 1024 after flatten(start_dim=1)
    hidden_features = 32
    latent_dims = 16

    key = jax.random.PRNGKey(0)
    k_x, k_eps, k_p = jax.random.split(key, 3)

    x = jax.random.uniform(k_x, (batch, channels, height, width), jnp.float32)
    eps = jax.random.normal(k_eps, (batch, latent_dims), jnp.float32)  # self.N.sample

    params = init_params(k_p, latent_dims, num_features, hidden_features)
    packed = pack_params(params)

    out = vae_forward(x, eps, packed)
    out = jax.block_until_ready(out)

    ref = vae_forward_ref(x.reshape(batch, -1), eps, params)
    np.testing.assert_allclose(np.asarray(out, dtype=np.float32),
                               np.asarray(ref, dtype=np.float32),
                               rtol=2e-2, atol=2e-2)

    print("KERNEL_OK")
</pallas_src>

<mosaic_0001>
module attributes {stable_mosaic.version = 11 : i64} {
  func.func @_vae_kernel(%arg0: i32, %arg1: memref<8x1024xf32, #tpu.memory_space<vmem>>, %arg2: memref<8x16xf32, #tpu.memory_space<vmem>>, %arg3: memref<1024x32xbf16, #tpu.memory_space<vmem>>, %arg4: memref<1x32xf32, #tpu.memory_space<vmem>>, %arg5: memref<32x256xbf16, #tpu.memory_space<vmem>>, %arg6: memref<1x256xf32, #tpu.memory_space<vmem>>, %arg7: memref<128x32xbf16, #tpu.memory_space<vmem>>, %arg8: memref<1x32xf32, #tpu.memory_space<vmem>>, %arg9: memref<32x1024xbf16, #tpu.memory_space<vmem>>, %arg10: memref<1x1024xf32, #tpu.memory_space<vmem>>, %arg11: memref<8x1024xf32, #tpu.memory_space<vmem>>, %arg12: memref<8x128xf32, #tpu.memory_space<vmem>>) attributes {dimension_semantics = [#tpu.dimension_semantics<parallel>], iteration_bounds = array<i64: 1>, scalar_prefetch = 0 : i64, scratch_operands = 1 : i64, tpu.core_type = #tpu.core_type<tc>, window_params = [{transform_indices = @transform_0, window_bounds = array<i64: 8, 1024>}, {transform_indices = @transform_1, window_bounds = array<i64: 8, 16>}, {pipeline_mode = #tpu.pipeline_mode<synchronous>, transform_indices = @transform_2, window_bounds = array<i64: 1024, 32>}, {pipeline_mode = #tpu.pipeline_mode<synchronous>, transform_indices = @transform_3, window_bounds = array<i64: 1, 32>}, {pipeline_mode = #tpu.pipeline_mode<synchronous>, transform_indices = @transform_4, window_bounds = array<i64: 32, 256>}, {pipeline_mode = #tpu.pipeline_mode<synchronous>, transform_indices = @transform_5, window_bounds = array<i64: 1, 256>}, {pipeline_mode = #tpu.pipeline_mode<synchronous>, transform_indices = @transform_6, window_bounds = array<i64: 128, 32>}, {pipeline_mode = #tpu.pipeline_mode<synchronous>, transform_indices = @transform_7, window_bounds = array<i64: 1, 32>}, {pipeline_mode = #tpu.pipeline_mode<synchronous>, transform_indices = @transform_8, window_bounds = array<i64: 32, 1024>}, {pipeline_mode = #tpu.pipeline_mode<synchronous>, transform_indices = @transform_9, window_bounds = array<i64: 1, 1024>}, {transform_indices = @transform_10, window_bounds = array<i64: 8, 1024>}]} {
    %c0 = arith.constant 0 : index
    %c0_0 = arith.constant 0 : index
    %0 = vector.load %arg1[%c0, %c0_0] : memref<8x1024xf32, #tpu.memory_space<vmem>>, vector<8x1024xf32>
    %1 = arith.truncf %0 : vector<8x1024xf32> to vector<8x1024xbf16>
    %c0_1 = arith.constant 0 : index
    %c0_2 = arith.constant 0 : index
    %2 = vector.load %arg3[%c0_1, %c0_2] : memref<1024x32xbf16, #tpu.memory_space<vmem>>, vector<1024x32xbf16>
    %cst = arith.constant dense<0.000000e+00> : vector<8x32xf32>
    %3 = tpu.matmul %1, %2, %cst {dimension_numbers = #tpu.dot_dimension_numbers<[1], [0], [0], [1], [0, 0, 1, 1], [], []>} : vector<8x1024xbf16>, vector<1024x32xbf16>, vector<8x32xf32> -> vector<8x32xf32>
    %c0_3 = arith.constant 0 : index
    %c0_4 = arith.constant 0 : index
    %4 = vector.load %arg4[%c0_3, %c0_4] : memref<1x32xf32, #tpu.memory_space<vmem>>, vector<1x32xf32>
    %5 = vector.broadcast %4 : vector<1x32xf32> to vector<8x32xf32>
    %6 = arith.addf %3, %5 : vector<8x32xf32>
    %cst_5 = arith.constant 0.000000e+00 : f32
    %7 = vector.broadcast %cst_5 : f32 to vector<8x32xf32>
    %8 = arith.maximumf %6, %7 : vector<8x32xf32>
    %9 = arith.truncf %8 : vector<8x32xf32> to vector<8x32xbf16>
    %c0_6 = arith.constant 0 : index
    %c0_7 = arith.constant 0 : index
    %10 = vector.load %arg5[%c0_6, %c0_7] : memref<32x256xbf16, #tpu.memory_space<vmem>>, vector<32x256xbf16>
    %cst_8 = arith.constant dense<0.000000e+00> : vector<8x256xf32>
    %11 = tpu.matmul %9, %10, %cst_8 {dimension_numbers = #tpu.dot_dimension_numbers<[1], [0], [0], [1], [0, 0, 1, 1], [], []>} : vector<8x32xbf16>, vector<32x256xbf16>, vector<8x256xf32> -> vector<8x256xf32>
    %c0_9 = arith.constant 0 : index
    %c0_10 = arith.constant 0 : index
    %12 = vector.load %arg6[%c0_9, %c0_10] : memref<1x256xf32, #tpu.memory_space<vmem>>, vector<1x256xf32>
    %13 = vector.broadcast %12 : vector<1x256xf32> to vector<8x256xf32>
    %14 = arith.addf %11, %13 : vector<8x256xf32>
    %15 = vector.extract_strided_slice %14 {offsets = [0, 0], sizes = [8, 128], strides = [1, 1]} : vector<8x256xf32> to vector<8x128xf32>
    %c0_11 = arith.constant 0 : index
    %c0_12 = arith.constant 0 : index
    %16 = vector.load %arg2[%c0_11, %c0_12] : memref<8x16xf32, #tpu.memory_space<vmem>>, vector<8x16xf32>
    %17 = vector.extract_strided_slice %14 {offsets = [0, 128], sizes = [8, 16], strides = [1, 1]} : vector<8x256xf32> to vector<8x16xf32>
    %18 = math.exp %17 : vector<8x16xf32>
    %c0_13 = arith.constant 0 : index
    %c0_14 = arith.constant 0 : index
    %19 = vector.load %arg12[%c0_13, %c0_14] : memref<8x128xf32, #tpu.memory_space<vmem>>, vector<8x128xf32>
    tpu.vector_store %arg12[%c0_13, %c0_14], %15 {strides = array<i32>} : memref<8x128xf32, #tpu.memory_space<vmem>>, vector<8x128xf32>,
    %20 = vector.extract_strided_slice %15 {offsets = [0, 0], sizes = [8, 16], strides = [1, 1]} : vector<8x128xf32> to vector<8x16xf32>
    %21 = arith.mulf %18, %16 : vector<8x16xf32>
    %22 = arith.addf %20, %21 : vector<8x16xf32>
    %c0_15 = arith.constant 0 : index
    %c0_16 = arith.constant 0 : index
    %23 = vector.load %arg12[%c0_15, %c0_16] : memref<8x128xf32, #tpu.memory_space<vmem>>, vector<8x16xf32>
    tpu.vector_store %arg12[%c0_15, %c0_16], %22 {strides = array<i32>} : memref<8x128xf32, #tpu.memory_space<vmem>>, vector<8x16xf32>,
    %c0_17 = arith.constant 0 : index
    %c0_18 = arith.constant 0 : index
    %24 = vector.load %arg12[%c0_17, %c0_18] : memref<8x128xf32, #tpu.memory_space<vmem>>, vector<8x128xf32>
    %25 = arith.truncf %24 : vector<8x128xf32> to vector<8x128xbf16>
    %c0_19 = arith.constant 0 : index
    %c0_20 = arith.constant 0 : index
    %26 = vector.load %arg7[%c0_19, %c0_20] : memref<128x32xbf16, #tpu.memory_space<vmem>>, vector<128x32xbf16>
    %cst_21 = arith.constant dense<0.000000e+00> : vector<8x32xf32>
    %27 = tpu.matmul %25, %26, %cst_21 {dimension_numbers = #tpu.dot_dimension_numbers<[1], [0], [0], [1], [0, 0, 1, 1], [], []>} : vector<8x128xbf16>, vector<128x32xbf16>, vector<8x32xf32> -> vector<8x32xf32>
    %c0_22 = arith.constant 0 : index
    %c0_23 = arith.constant 0 : index
    %28 = vector.load %arg8[%c0_22, %c0_23] : memref<1x32xf32, #tpu.memory_space<vmem>>, vector<1x32xf32>
    %29 = vector.broadcast %28 : vector<1x32xf32> to vector<8x32xf32>
    %30 = arith.addf %27, %29 : vector<8x32xf32>
    %cst_24 = arith.constant 0.000000e+00 : f32
    %31 = vector.broadcast %cst_24 : f32 to vector<8x32xf32>
    %32 = arith.maximumf %30, %31 : vector<8x32xf32>
    %33 = arith.truncf %32 : vector<8x32xf32> to vector<8x32xbf16>
    %c0_25 = arith.constant 0 : index
    %c0_26 = arith.constant 0 : index
    %34 = vector.load %arg9[%c0_25, %c0_26] : memref<32x1024xbf16, #tpu.memory_space<vmem>>, vector<32x1024xbf16>
    %cst_27 = arith.constant dense<0.000000e+00> : vector<8x1024xf32>
    %35 = tpu.matmul %33, %34, %cst_27 {dimension_numbers = #tpu.dot_dimension_numbers<[1], [0], [0], [1], [0, 0, 1, 1], [], []>} : vector<8x32xbf16>, vector<32x1024xbf16>, vector<8x1024xf32> -> vector<8x1024xf32>
    %c0_28 = arith.constant 0 : index
    %c0_29 = arith.constant 0 : index
    %36 = vector.load %arg10[%c0_28, %c0_29] : memref<1x1024xf32, #tpu.memory_space<vmem>>, vector<1x1024xf32>
    %37 = vector.broadcast %36 : vector<1x1024xf32> to vector<8x1024xf32>
    %38 = arith.addf %35, %37 : vector<8x1024xf32>
    %39 = arith.negf %38 : vector<8x1024xf32>
    %40 = math.exp %39 : vector<8x1024xf32>
    %cst_30 = arith.constant 1.000000e+00 : f32
    %41 = vector.broadcast %cst_30 : f32 to vector<8x1024xf32>
    %42 = arith.addf %41, %40 : vector<8x1024xf32>
    %43 = arith.divf %41, %42 : vector<8x1024xf32>
    %c0_31 = arith.constant 0 : index
    %c0_32 = arith.constant 0 : index
    %44 = vector.load %arg11[%c0_31, %c0_32] : memref<8x1024xf32, #tpu.memory_space<vmem>>, vector<8x1024xf32>
    tpu.vector_store %arg11[%c0_31, %c0_32], %43 {strides = array<i32>} : memref<8x1024xf32, #tpu.memory_space<vmem>>, vector<8x1024xf32>,
    return
  }
  func.func @transform_0(%arg0: i32) -> (i32, i32) {
    %c0_i32 = arith.constant 0 : i32
    %c0_i32_0 = arith.constant 0 : i32
    return %arg0, %c0_i32 : i32, i32
  }
  func.func @transform_1(%arg0: i32) -> (i32, i32) {
    %c0_i32 = arith.constant 0 : i32
    %c0_i32_0 = arith.constant 0 : i32
    return %arg0, %c0_i32 : i32, i32
  }
  func.func @transform_2(%arg0: i32) -> (i32, i32) {
    %c0_i32 = arith.constant 0 : i32
    %c0_i32_0 = arith.constant 0 : i32
    %c0_i32_1 = arith.constant 0 : i32
    return %c0_i32, %c0_i32_0 : i32, i32
  }
  func.func @transform_3(%arg0: i32) -> (i32, i32) {
    %c0_i32 = arith.constant 0 : i32
    %c0_i32_0 = arith.constant 0 : i32
    %c0_i32_1 = arith.constant 0 : i32
    return %c0_i32, %c0_i32_0 : i32, i32
  }
  func.func @transform_4(%arg0: i32) -> (i32, i32) {
    %c0_i32 = arith.constant 0 : i32
    %c0_i32_0 = arith.constant 0 : i32
    %c0_i32_1 = arith.constant 0 : i32
    return %c0_i32, %c0_i32_0 : i32, i32
  }
  func.func @transform_5(%arg0: i32) -> (i32, i32) {
    %c0_i32 = arith.constant 0 : i32
    %c0_i32_0 = arith.constant 0 : i32
    %c0_i32_1 = arith.constant 0 : i32
    return %c0_i32, %c0_i32_0 : i32, i32
  }
  func.func @transform_6(%arg0: i32) -> (i32, i32) {
    %c0_i32 = arith.constant 0 : i32
    %c0_i32_0 = arith.constant 0 : i32
    %c0_i32_1 = arith.constant 0 : i32
    return %c0_i32, %c0_i32_0 : i32, i32
  }
  func.func @transform_7(%arg0: i32) -> (i32, i32) {
    %c0_i32 = arith.constant 0 : i32
    %c0_i32_0 = arith.constant 0 : i32
    %c0_i32_1 = arith.constant 0 : i32
    return %c0_i32, %c0_i32_0 : i32, i32
  }
  func.func @transform_8(%arg0: i32) -> (i32, i32) {
    %c0_i32 = arith.constant 0 : i32
    %c0_i32_0 = arith.constant 0 : i32
    %c0_i32_1 = arith.constant 0 : i32
    return %c0_i32, %c0_i32_0 : i32, i32
  }
  func.func @transform_9(%arg0: i32) -> (i32, i32) {
    %c0_i32 = arith.constant 0 : i32
    %c0_i32_0 = arith.constant 0 : i32
    %c0_i32_1 = arith.constant 0 : i32
    return %c0_i32, %c0_i32_0 : i32, i32
  }
  func.func @transform_10(%arg0: i32) -> (i32, i32) {
    %c0_i32 = arith.constant 0 : i32
    %c0_i32_0 = arith.constant 0 : i32
    return %arg0, %c0_i32 : i32, i32
  }
}

</mosaic_0001>

<llo_original>
// kernel: _vae_forward_impl.1
$region0: #{_vae_forward_impl.1}
  #allocation0 [shape = 'u32[]', space=smem, size = 0x4, offset = 0x4, fixed_abs, tag = 'smem constant byte address 0x4 - core index']
  #allocation1 [shape = 'u32[144,128]{1,0:T(1,128)}', space=vmem, size = 0x12000, scoped, tag = 'internal scratch']
  #allocation2 [shape = 'f32[8,128]{1,0:T(8,128)}', space=vmem, size = 0x1000, scoped, tag = 'scratch operand']
  %s0 = inlined_call_operand.vmem [shape: f32[8,1024], index: 0, kind: input, shape index: {}]
  %s1 = inlined_call_operand.vmem [shape: f32[8,16], index: 1, kind: input, shape index: {}]
  %s2 = inlined_call_operand.vmem [shape: bf16[1024,32], index: 2, kind: input, shape index: {}]
  %s3 = inlined_call_operand.vmem [shape: f32[1,32], index: 3, kind: input, shape index: {}]
  %s4 = inlined_call_operand.vmem [shape: bf16[32,256], index: 4, kind: input, shape index: {}]
  %s5 = inlined_call_operand.vmem [shape: f32[1,256], index: 5, kind: input, shape index: {}]
  %s6 = inlined_call_operand.vmem [shape: bf16[128,32], index: 6, kind: input, shape index: {}]
  %s7 = inlined_call_operand.vmem [shape: f32[1,32], index: 7, kind: input, shape index: {}]
  %s8 = inlined_call_operand.vmem [shape: bf16[32,1024], index: 8, kind: input, shape index: {}]
  %s9 = inlined_call_operand.vmem [shape: f32[1,1024], index: 9, kind: input, shape index: {}]
  %s10 = inlined_call_operand.vmem [shape: f32[8,1024], index: 10, kind: output, shape index: {}]
  %s11 = sld [smem:[#allocation0]]
  $region50: #{_vae_forward_impl.1} parent=0
    _
  %s13 = ssub.s32 1, %s11
  %s14 = scalar_select 0, %s13, %s11
  // Predicated region
  $region2: #{_vae_forward_impl.1} parent=0 // pred_check
    _
  $region3: #{_vae_forward_impl.1} parent=0 // pred_check_branch
    %16 = sbr.rel (0) target = $region5
  $region4: #{_vae_forward_impl.1} parent=0 // pred_region
    _
  $region5: #{_vae_forward_impl.1} parent=0 // pred_fallthru
    _
  // Predicated region
  $region6: #{_vae_forward_impl.1} parent=0 // pred_check
    _
  $region7: #{_vae_forward_impl.1} parent=0 // pred_check_branch
    %18 = sbr.rel (0) target = $region9
  $region8: #{_vae_forward_impl.1} parent=0 // pred_region
    _
  $region9: #{_vae_forward_impl.1} parent=0 // pred_fallthru
    _
  // Predicated region
  $region10: #{_vae_forward_impl.1} parent=0 // pred_check
    _
  $region11: #{_vae_forward_impl.1} parent=0 // pred_check_branch
    %20 = sbr.rel (0) target = $region13
  $region12: #{_vae_forward_impl.1} parent=0 // pred_region
    _
  $region13: #{_vae_forward_impl.1} parent=0 // pred_fallthru
    _
  // Predicated region
  $region14: #{_vae_forward_impl.1} parent=0 // pred_check
    _
  $region15: #{_vae_forward_impl.1} parent=0 // pred_check_branch
    %22 = sbr.rel (0) target = $region17
  $region16: #{_vae_forward_impl.1} parent=0 // pred_region
    _
  $region17: #{_vae_forward_impl.1} parent=0 // pred_fallthru
    _
  // Predicated region
  $region18: #{_vae_forward_impl.1} parent=0 // pred_check
    _
  $region19: #{_vae_forward_impl.1} parent=0 // pred_check_branch
    %24 = sbr.rel (0) target = $region21
  $region20: #{_vae_forward_impl.1} parent=0 // pred_region
    _
  $region21: #{_vae_forward_impl.1} parent=0 // pred_fallthru
    _
  // Predicated region
  $region22: #{_vae_forward_impl.1} parent=0 // pred_check
    _
  $region23: #{_vae_forward_impl.1} parent=0 // pred_check_branch
    %26 = sbr.rel (0) target = $region25
  $region24: #{_vae_forward_impl.1} parent=0 // pred_region
    _
  $region25: #{_vae_forward_impl.1} parent=0 // pred_fallthru
    _
  // Predicated region
  $region26: #{_vae_forward_impl.1} parent=0 // pred_check
    _
  $region27: #{_vae_forward_impl.1} parent=0 // pred_check_branch
    %28 = sbr.rel (0) target = $region29
  $region28: #{_vae_forward_impl.1} parent=0 // pred_region
    _
  $region29: #{_vae_forward_impl.1} parent=0 // pred_fallthru
    _
  // Predicated region
  $region30: #{_vae_forward_impl.1} parent=0 // pred_check
    _
  $region31: #{_vae_forward_impl.1} parent=0 // pred_check_branch
    %30 = sbr.rel (0) target = $region33
  $region32: #{_vae_forward_impl.1} parent=0 // pred_region
    _
  $region33: #{_vae_forward_impl.1} parent=0 // pred_fallthru
    _
  // Predicated region
  $region34: #{_vae_forward_impl.1} parent=0 // pred_check
    _
  $region35: #{_vae_forward_impl.1} parent=0 // pred_check_branch
    %32 = sbr.rel (0) target = $region37
  $region36: #{_vae_forward_impl.1} parent=0 // pred_region
    _
  $region37: #{_vae_forward_impl.1} parent=0 // pred_fallthru
    _
  // Predicated region
  $region38: #{_vae_forward_impl.1} parent=0 // pred_check
    _
  $region39: #{_vae_forward_impl.1} parent=0 // pred_check_branch
    %34 = sbr.rel (0) target = $region41
  $region40: #{_vae_forward_impl.1} parent=0 // pred_region
    _
  $region41: #{_vae_forward_impl.1} parent=0 // pred_fallthru
    _
  %v36 = vld [vmem:[%s0] sm:$0xff]
  %v37 = vld [vmem:[%s0 + $0x8] sm:$0xff]
  %v38 = vld [vmem:[%s0 + $0x10] sm:$0xff]
  %v39 = vld [vmem:[%s0 + $0x18] sm:$0xff]
  %v40 = vld [vmem:[%s0 + $0x20] sm:$0xff]
  %v41 = vld [vmem:[%s0 + $0x28] sm:$0xff]
  %v42 = vld [vmem:[%s0 + $0x30] sm:$0xff]
  %v43 = vld [vmem:[%s0 + $0x38] sm:$0xff]
  %v44 = vpack.c.bf16 %v36, %v36
  %v45 = vpack.c.bf16 %v37, %v37
  %v46 = vpack.c.bf16 %v38, %v38
  %v47 = vpack.c.bf16 %v39, %v39
  %v48 = vpack.c.bf16 %v40, %v40
  %v49 = vpack.c.bf16 %v41, %v41
  %v50 = vpack.c.bf16 %v42, %v42
  %v51 = vpack.c.bf16 %v43, %v43
  %v52 = vld [vmem:[%s2] sm:$0xf]
  %v53 = vld [vmem:[%s2 + $0x4] sm:$0xf]
  %v54 = vld [vmem:[%s2 + $0x8] sm:$0xf]
  %v55 = vld [vmem:[%s2 + $0xc] sm:$0xf]
  %v56 = vld [vmem:[%s2 + $0x10] sm:$0xf]
  %v57 = vld [vmem:[%s2 + $0x14] sm:$0xf]
  %v58 = vld [vmem:[%s2 + $0x18] sm:$0xf]
  %v59 = vld [vmem:[%s2 + $0x1c] sm:$0xf]
  %v60 = vld [vmem:[%s2 + $0x20] sm:$0xf]
  %v61 = vld [vmem:[%s2 + $0x24] sm:$0xf]
  %v62 = vld [vmem:[%s2 + $0x28] sm:$0xf]
  %v63 = vld [vmem:[%s2 + $0x2c] sm:$0xf]
  %v64 = vld [vmem:[%s2 + $0x30] sm:$0xf]
  %v65 = vld [vmem:[%s2 + $0x34] sm:$0xf]
  %v66 = vld [vmem:[%s2 + $0x38] sm:$0xf]
  %v67 = vld [vmem:[%s2 + $0x3c] sm:$0xf]
  %v68 = vld [vmem:[%s2 + $0x40] sm:$0xf]
  %v69 = vld [vmem:[%s2 + $0x44] sm:$0xf]
  %v70 = vld [vmem:[%s2 + $0x48] sm:$0xf]
  %v71 = vld [vmem:[%s2 + $0x4c] sm:$0xf]
  %v72 = vld [vmem:[%s2 + $0x50] sm:$0xf]
  %v73 = vld [vmem:[%s2 + $0x54] sm:$0xf]
  %v74 = vld [vmem:[%s2 + $0x58] sm:$0xf]
  %v75 = vld [vmem:[%s2 + $0x5c] sm:$0xf]
  %v76 = vld [vmem:[%s2 + $0x60] sm:$0xf]
  %v77 = vld [vmem:[%s2 + $0x64] sm:$0xf]
  %v78 = vld [vmem:[%s2 + $0x68] sm:$0xf]
  %v79 = vld [vmem:[%s2 + $0x6c] sm:$0xf]
  %v80 = vld [vmem:[%s2 + $0x70] sm:$0xf]
  %v81 = vld [vmem:[%s2 + $0x74] sm:$0xf]
  %v82 = vld [vmem:[%s2 + $0x78] sm:$0xf]
  %v83 = vld [vmem:[%s2 + $0x7c] sm:$0xf]
  %v84 = vld [vmem:[%s2 + $0x80] sm:$0xf]
  %v85 = vld [vmem:[%s2 + $0x84] sm:$0xf]
  %v86 = vld [vmem:[%s2 + $0x88] sm:$0xf]
  %v87 = vld [vmem:[%s2 + $0x8c] sm:$0xf]
  %v88 = vld [vmem:[%s2 + $0x90] sm:$0xf]
  %v89 = vld [vmem:[%s2 + $0x94] sm:$0xf]
  %v90 = vld [vmem:[%s2 + $0x98] sm:$0xf]
  %v91 = vld [vmem:[%s2 + $0x9c] sm:$0xf]
  %v92 = vld [vmem:[%s2 + $0xa0] sm:$0xf]
  %v93 = vld [vmem:[%s2 + $0xa4] sm:$0xf]
  %v94 = vld [vmem:[%s2 + $0xa8] sm:$0xf]
  %v95 = vld [vmem:[%s2 + $0xac] sm:$0xf]
  %v96 = vld [vmem:[%s2 + $0xb0] sm:$0xf]
  %v97 = vld [vmem:[%s2 + $0xb4] sm:$0xf]
  %v98 = vld [vmem:[%s2 + $0xb8] sm:$0xf]
  %v99 = vld [vmem:[%s2 + $0xbc] sm:$0xf]
  %v100 = vld [vmem:[%s2 + $0xc0] sm:$0xf]
  %v101 = vld [vmem:[%s2 + $0xc4] sm:$0xf]
  %v102 = vld [vmem:[%s2 + $0xc8] sm:$0xf]
  %v103 = vld [vmem:[%s2 + $0xcc] sm:$0xf]
  %v104 = vld [vmem:[%s2 + $0xd0] sm:$0xf]
  %v105 = vld [vmem:[%s2 + $0xd4] sm:$0xf]
  %v106 = vld [vmem:[%s2 + $0xd8] sm:$0xf]
  %v107 = vld [vmem:[%s2 + $0xdc] sm:$0xf]
  %v108 = vld [vmem:[%s2 + $0xe0] sm:$0xf]
  %v109 = vld [vmem:[%s2 + $0xe4] sm:$0xf]
  %v110 = vld [vmem:[%s2 + $0xe8] sm:$0xf]
  %v111 = vld [vmem:[%s2 + $0xec] sm:$0xf]
  %v112 = vld [vmem:[%s2 + $0xf0] sm:$0xf]
  %v113 = vld [vmem:[%s2 + $0xf4] sm:$0xf]
  %v114 = vld [vmem:[%s2 + $0xf8] sm:$0xf]
  %v115 = vld [vmem:[%s2 + $0xfc] sm:$0xf]
  %v116 = vld [vmem:[%s2 + $0x100] sm:$0xf]
  %v117 = vld [vmem:[%s2 + $0x104] sm:$0xf]
  %v118 = vld [vmem:[%s2 + $0x108] sm:$0xf]
  %v119 = vld [vmem:[%s2 + $0x10c] sm:$0xf]
  %v120 = vld [vmem:[%s2 + $0x110] sm:$0xf]
  %v121 = vld [vmem:[%s2 + $0x114] sm:$0xf]
  %v122 = vld [vmem:[%s2 + $0x118] sm:$0xf]
  %v123 = vld [vmem:[%s2 + $0x11c] sm:$0xf]
  %v124 = vld [vmem:[%s2 + $0x120] sm:$0xf]
  %v125 = vld [vmem:[%s2 + $0x124] sm:$0xf]
  %v126 = vld [vmem:[%s2 + $0x128] sm:$0xf]
  %v127 = vld [vmem:[%s2 + $0x12c] sm:$0xf]
  %v128 = vld [vmem:[%s2 + $0x130] sm:$0xf]
  %v129 = vld [vmem:[%s2 + $0x134] sm:$0xf]
  %v130 = vld [vmem:[%s2 + $0x138] sm:$0xf]
  %v131 = vld [vmem:[%s2 + $0x13c] sm:$0xf]
  %v132 = vld [vmem:[%s2 + $0x140] sm:$0xf]
  %v133 = vld [vmem:[%s2 + $0x144] sm:$0xf]
  %v134 = vld [vmem:[%s2 + $0x148] sm:$0xf]
  %v135 = vld [vmem:[%s2 + $0x14c] sm:$0xf]
  %v136 = vld [vmem:[%s2 + $0x150] sm:$0xf]
  %v137 = vld [vmem:[%s2 + $0x154] sm:$0xf]
  %v138 = vld [vmem:[%s2 + $0x158] sm:$0xf]
  %v139 = vld [vmem:[%s2 + $0x15c] sm:$0xf]
  %v140 = vld [vmem:[%s2 + $0x160] sm:$0xf]
  %v141 = vld [vmem:[%s2 + $0x164] sm:$0xf]
  %v142 = vld [vmem:[%s2 + $0x168] sm:$0xf]
  %v143 = vld [vmem:[%s2 + $0x16c] sm:$0xf]
  %v144 = vld [vmem:[%s2 + $0x170] sm:$0xf]
  %v145 = vld [vmem:[%s2 + $0x174] sm:$0xf]
  %v146 = vld [vmem:[%s2 + $0x178] sm:$0xf]
  %v147 = vld [vmem:[%s2 + $0x17c] sm:$0xf]
  %v148 = vld [vmem:[%s2 + $0x180] sm:$0xf]
  %v149 = vld [vmem:[%s2 + $0x184] sm:$0xf]
  %v150 = vld [vmem:[%s2 + $0x188] sm:$0xf]
  %v151 = vld [vmem:[%s2 + $0x18c] sm:$0xf]
  %v152 = vld [vmem:[%s2 + $0x190] sm:$0xf]
  %v153 = vld [vmem:[%s2 + $0x194] sm:$0xf]
  %v154 = vld [vmem:[%s2 + $0x198] sm:$0xf]
  %v155 = vld [vmem:[%s2 + $0x19c] sm:$0xf]
  %v156 = vld [vmem:[%s2 + $0x1a0] sm:$0xf]
  %v157 = vld [vmem:[%s2 + $0x1a4] sm:$0xf]
  %v158 = vld [vmem:[%s2 + $0x1a8] sm:$0xf]
  %v159 = vld [vmem:[%s2 + $0x1ac] sm:$0xf]
  %v160 = vld [vmem:[%s2 + $0x1b0] sm:$0xf]
  %v161 = vld [vmem:[%s2 + $0x1b4] sm:$0xf]
  %v162 = vld [vmem:[%s2 + $0x1b8] sm:$0xf]
  %v163 = vld [vmem:[%s2 + $0x1bc] sm:$0xf]
  %v164 = vld [vmem:[%s2 + $0x1c0] sm:$0xf]
  %v165 = vld [vmem:[%s2 + $0x1c4] sm:$0xf]
  %v166 = vld [vmem:[%s2 + $0x1c8] sm:$0xf]
  %v167 = vld [vmem:[%s2 + $0x1cc] sm:$0xf]
  %v168 = vld [vmem:[%s2 + $0x1d0] sm:$0xf]
  %v169 = vld [vmem:[%s2 + $0x1d4] sm:$0xf]
  %v170 = vld [vmem:[%s2 + $0x1d8] sm:$0xf]
  %v171 = vld [vmem:[%s2 + $0x1dc] sm:$0xf]
  %v172 = vld [vmem:[%s2 + $0x1e0] sm:$0xf]
  %v173 = vld [vmem:[%s2 + $0x1e4] sm:$0xf]
  %v174 = vld [vmem:[%s2 + $0x1e8] sm:$0xf]
  %v175 = vld [vmem:[%s2 + $0x1ec] sm:$0xf]
  %v176 = vld [vmem:[%s2 + $0x1f0] sm:$0xf]
  %v177 = vld [vmem:[%s2 + $0x1f4] sm:$0xf]
  %v178 = vld [vmem:[%s2 + $0x1f8] sm:$0xf]
  %v179 = vld [vmem:[%s2 + $0x1fc] sm:$0xf]
  %v180 = vld [vmem:[%s3] sm:$0x1]
  %v182 = vlaneseq
  %v183 = vshrl.u32 %v182, 7
  %v184 = vsub.s32 0, %v183
  %v185 = vrot.slane %v180, %v184
  %v315 = vunpack.c.l.b16 %v52
  %v316 = vunpack.c.l.b16 %v53
  %v317 = vunpack.c.l.b16 %v54
  %v318 = vunpack.c.l.b16 %v55
  %v319 = vunpack.c.l.b16 %v56
  %v320 = vunpack.c.l.b16 %v57
  %v321 = vunpack.c.l.b16 %v58
  %v322 = vunpack.c.l.b16 %v59
  %v323 = vunpack.c.l.b16 %v60
  %v324 = vunpack.c.l.b16 %v61
  %v325 = vunpack.c.l.b16 %v62
  %v326 = vunpack.c.l.b16 %v63
  %v327 = vunpack.c.l.b16 %v64
  %v328 = vunpack.c.l.b16 %v65
  %v329 = vunpack.c.l.b16 %v66
  %v330 = vunpack.c.l.b16 %v67
  %v331 = vunpack.c.l.b16 %v68
  %v332 = vunpack.c.l.b16 %v69
  %v333 = vunpack.c.l.b16 %v70
  %v334 = vunpack.c.l.b16 %v71
  %v335 = vunpack.c.l.b16 %v72
  %v336 = vunpack.c.l.b16 %v73
  %v337 = vunpack.c.l.b16 %v74
  %v338 = vunpack.c.l.b16 %v75
  %v339 = vunpack.c.l.b16 %v76
  %v340 = vunpack.c.l.b16 %v77
  %v341 = vunpack.c.l.b16 %v78
  %v342 = vunpack.c.l.b16 %v79
  %v343 = vunpack.c.l.b16 %v80
  %v344 = vunpack.c.l.b16 %v81
  %v345 = vunpack.c.l.b16 %v82
  %v346 = vunpack.c.l.b16 %v83
  %v347 = vunpack.c.l.b16 %v84
  %v348 = vunpack.c.l.b16 %v85
  %v349 = vunpack.c.l.b16 %v86
  %v350 = vunpack.c.l.b16 %v87
  %v351 = vunpack.c.l.b16 %v88
  %v352 = vunpack.c.l.b16 %v89
  %v353 = vunpack.c.l.b16 %v90
  %v354 = vunpack.c.l.b16 %v91
  %v355 = vunpack.c.l.b16 %v92
  %v356 = vunpack.c.l.b16 %v93
  %v357 = vunpack.c.l.b16 %v94
  %v358 = vunpack.c.l.b16 %v95
  %v359 = vunpack.c.l.b16 %v96
  %v360 = vunpack.c.l.b16 %v97
  %v361 = vunpack.c.l.b16 %v98
  %v362 = vunpack.c.l.b16 %v99
  %v363 = vunpack.c.l.b16 %v100
  %v364 = vunpack.c.l.b16 %v101
  %v365 = vunpack.c.l.b16 %v102
  %v366 = vunpack.c.l.b16 %v103
  %v367 = vunpack.c.l.b16 %v104
  %v368 = vunpack.c.l.b16 %v105
  %v369 = vunpack.c.l.b16 %v106
  %v370 = vunpack.c.l.b16 %v107
  %v371 = vunpack.c.l.b16 %v108
  %v372 = vunpack.c.l.b16 %v109
  %v373 = vunpack.c.l.b16 %v110
  %v374 = vunpack.c.l.b16 %v111
  %v375 = vunpack.c.l.b16 %v112
  %v376 = vunpack.c.l.b16 %v113
  %v377 = vunpack.c.l.b16 %v114
  %v378 = vunpack.c.l.b16 %v115
  %v379 = vunpack.c.l.b16 %v116
  %v380 = vunpack.c.l.b16 %v117
  %v381 = vunpack.c.l.b16 %v118
  %v382 = vunpack.c.l.b16 %v119
  %v383 = vunpack.c.l.b16 %v120
  %v384 = vunpack.c.l.b16 %v121
  %v385 = vunpack.c.l.b16 %v122
  %v386 = vunpack.c.l.b16 %v123
  %v387 = vunpack.c.l.b16 %v124
  %v388 = vunpack.c.l.b16 %v125
  %v389 = vunpack.c.l.b16 %v126
  %v390 = vunpack.c.l.b16 %v127
  %v391 = vunpack.c.l.b16 %v128
  %v392 = vunpack.c.l.b16 %v129
  %v393 = vunpack.c.l.b16 %v130
  %v394 = vunpack.c.l.b16 %v131
  %v395 = vunpack.c.l.b16 %v132
  %v396 = vunpack.c.l.b16 %v133
  %v397 = vunpack.c.l.b16 %v134
  %v398 = vunpack.c.l.b16 %v135
  %v399 = vunpack.c.l.b16 %v136
  %v400 = vunpack.c.l.b16 %v137
  %v401 = vunpack.c.l.b16 %v138
  %v402 = vunpack.c.l.b16 %v139
  %v403 = vunpack.c.l.b16 %v140
  %v404 = vunpack.c.l.b16 %v141
  %v405 = vunpack.c.l.b16 %v142
  %v406 = vunpack.c.l.b16 %v143
  %v407 = vunpack.c.l.b16 %v144
  %v408 = vunpack.c.l.b16 %v145
  %v409 = vunpack.c.l.b16 %v146
  %v410 = vunpack.c.l.b16 %v147
  %v411 = vunpack.c.l.b16 %v148
  %v412 = vunpack.c.l.b16 %v149
  %v413 = vunpack.c.l.b16 %v150
  %v414 = vunpack.c.l.b16 %v151
  %v415 = vunpack.c.l.b16 %v152
  %v416 = vunpack.c.l.b16 %v153
  %v417 = vunpack.c.l.b16 %v154
  %v418 = vunpack.c.l.b16 %v155
  %v419 = vunpack.c.l.b16 %v156
  %v420 = vunpack.c.l.b16 %v157
  %v421 = vunpack.c.l.b16 %v158
  %v422 = vunpack.c.l.b16 %v159
  %v423 = vunpack.c.l.b16 %v160
  %v424 = vunpack.c.l.b16 %v161
  %v425 = vunpack.c.l.b16 %v162
  %v426 = vunpack.c.l.b16 %v163
  %v427 = vunpack.c.l.b16 %v164
  %v428 = vunpack.c.l.b16 %v165
  %v429 = vunpack.c.l.b16 %v166
  %v430 = vunpack.c.l.b16 %v167
  %v431 = vunpack.c.l.b16 %v168
  %v432 = vunpack.c.l.b16 %v169
  %v433 = vunpack.c.l.b16 %v170
  %v434 = vunpack.c.l.b16 %v171
  %v435 = vunpack.c.l.b16 %v172
  %v436 = vunpack.c.l.b16 %v173
  %v437 = vunpack.c.l.b16 %v174
  %v438 = vunpack.c.l.b16 %v175
  %v439 = vunpack.c.l.b16 %v176
  %v440 = vunpack.c.l.b16 %v177
  %v441 = vunpack.c.l.b16 %v178
  %v442 = vunpack.c.l.b16 %v179
  %v443 = vpack.c.b16 %v316, %v315
  %v444 = vpack.c.b16 %v318, %v317
  %v445 = vpack.c.b16 %v320, %v319
  %v446 = vpack.c.b16 %v322, %v321
  %v447 = vpack.c.b16 %v324, %v323
  %v448 = vpack.c.b16 %v326, %v325
  %v449 = vpack.c.b16 %v328, %v327
  %v450 = vpack.c.b16 %v330, %v329
  %v451 = vpack.c.b16 %v332, %v331
  %v452 = vpack.c.b16 %v334, %v333
  %v453 = vpack.c.b16 %v336, %v335
  %v454 = vpack.c.b16 %v338, %v337
  %v455 = vpack.c.b16 %v340, %v339
  %v456 = vpack.c.b16 %v342, %v341
  %v457 = vpack.c.b16 %v344, %v343
  %v458 = vpack.c.b16 %v346, %v345
  %v459 = vpack.c.b16 %v348, %v347
  %v460 = vpack.c.b16 %v350, %v349
  %v461 = vpack.c.b16 %v352, %v351
  %v462 = vpack.c.b16 %v354, %v353
  %v463 = vpack.c.b16 %v356, %v355
  %v464 = vpack.c.b16 %v358, %v357
  %v465 = vpack.c.b16 %v360, %v359
  %v466 = vpack.c.b16 %v362, %v361
  %v467 = vpack.c.b16 %v364, %v363
  %v468 = vpack.c.b16 %v366, %v365
  %v469 = vpack.c.b16 %v368, %v367
  %v470 = vpack.c.b16 %v370, %v369
  %v471 = vpack.c.b16 %v372, %v371
  %v472 = vpack.c.b16 %v374, %v373
  %v473 = vpack.c.b16 %v376, %v375
  %v474 = vpack.c.b16 %v378, %v377
  %v475 = vpack.c.b16 %v380, %v379
  %v476 = vpack.c.b16 %v382, %v381
  %v477 = vpack.c.b16 %v384, %v383
  %v478 = vpack.c.b16 %v386, %v385
  %v479 = vpack.c.b16 %v388, %v387
  %v480 = vpack.c.b16 %v390, %v389
  %v481 = vpack.c.b16 %v392, %v391
  %v482 = vpack.c.b16 %v394, %v393
  %v483 = vpack.c.b16 %v396, %v395
  %v484 = vpack.c.b16 %v398, %v397
  %v485 = vpack.c.b16 %v400, %v399
  %v486 = vpack.c.b16 %v402, %v401
  %v487 = vpack.c.b16 %v404, %v403
  %v488 = vpack.c.b16 %v406, %v405
  %v489 = vpack.c.b16 %v408, %v407
  %v490 = vpack.c.b16 %v410, %v409
  %v491 = vpack.c.b16 %v412, %v411
  %v492 = vpack.c.b16 %v414, %v413
  %v493 = vpack.c.b16 %v416, %v415
  %v494 = vpack.c.b16 %v418, %v417
  %v495 = vpack.c.b16 %v420, %v419
  %v496 = vpack.c.b16 %v422, %v421
  %v497 = vpack.c.b16 %v424, %v423
  %v498 = vpack.c.b16 %v426, %v425
  %v499 = vpack.c.b16 %v428, %v427
  %v500 = vpack.c.b16 %v430, %v429
  %v501 = vpack.c.b16 %v432, %v431
  %v502 = vpack.c.b16 %v434, %v433
  %v503 = vpack.c.b16 %v436, %v435
  %v504 = vpack.c.b16 %v438, %v437
  %v505 = vpack.c.b16 %v440, %v439
  %v506 = vpack.c.b16 %v442, %v441
  %571 = vmatprep.subr.bf16.mxu0 0
  %572 = vmatpush1.bf16.msra.mxu0 %v450
  %573 = vmatprep.subr.bf16.mxu0 0
  %574 = vmatpush1.bf16.msra.mxu0 %v449
  %575 = vmatprep.subr.bf16.mxu0 0
  %576 = vmatpush1.bf16.msra.mxu0 %v448
  %577 = vmatprep.subr.bf16.mxu0 0
  %578 = vmatpush1.bf16.msra.mxu0 %v447
  %579 = vmatprep.subr.bf16.mxu0 0
  %580 = vmatpush1.bf16.msra.mxu0 %v446
  %581 = vmatprep.subr.bf16.mxu0 0
  %582 = vmatpush1.bf16.msra.mxu0 %v445
  %583 = vmatprep.subr.bf16.mxu0 0
  %584 = vmatpush1.bf16.msra.mxu0 %v444
  %585 = vmatprep.subr.bf16.mxu0 0
  %586 = vmatpush1.bf16.msra.mxu0 %v443
  %587 = vmatprep.subr.bf16.mxu0 0
  %588 = vmatpush2.bf16.msra.mxu0 %v458
  %589 = vmatprep.subr.bf16.mxu0 0
  %590 = vmatpush2.bf16.msra.mxu0 %v457
  %591 = vmatprep.subr.bf16.mxu0 0
  %592 = vmatpush2.bf16.msra.mxu0 %v456
  %593 = vmatprep.subr.bf16.mxu0 0
  %594 = vmatpush2.bf16.msra.mxu0 %v455
  %595 = vmatprep.subr.bf16.mxu0 0
  %596 = vmatpush2.bf16.msra.mxu0 %v454
  %597 = vmatprep.subr.bf16.mxu0 0
  %598 = vmatpush2.bf16.msra.mxu0 %v453
  %599 = vmatprep.subr.bf16.mxu0 0
  %600 = vmatpush2.bf16.msra.mxu0 %v452
  %601 = vmatprep.subr.bf16.mxu0 0
  %602 = vmatpush2.bf16.msra.mxu0 %v451
  %603 = vmatprep.mubr.bf16.mxu0 %v45
  %604 = vmatmul.mubr.bf16.gmra.mxu0 %v44
  %v605 = vpop.f32.mrf.mxu0
  %v606 = vadd.f32 %v185, %v605
  %v607 = vpop.f32.mrf.mxu0
  %v608 = vpop.f32.mrf.mxu0
  %v609 = vpop.f32.mrf.mxu0
  %610 = vdwg.mxu0
  %611 = vmatprep.subr.bf16.mxu0 0
  %612 = vmatpush1.bf16.msra.mxu0 %v466
  %613 = vmatprep.subr.bf16.mxu0 0
  %614 = vmatpush1.bf16.msra.mxu0 %v465
  %615 = vmatprep.subr.bf16.mxu0 0
  %616 = vmatpush1.bf16.msra.mxu0 %v464
  %617 = vmatprep.subr.bf16.mxu0 0
  %618 = vmatpush1.bf16.msra.mxu0 %v463
  %619 = vmatprep.subr.bf16.mxu0 0
  %620 = vmatpush1.bf16.msra.mxu0 %v462
  %621 = vmatprep.subr.bf16.mxu0 0
  %622 = vmatpush1.bf16.msra.mxu0 %v461
  %623 = vmatprep.subr.bf16.mxu0 0
  %624 = vmatpush1.bf16.msra.mxu0 %v460
  %625 = vmatprep.subr.bf16.mxu0 0
  %626 = vmatpush1.bf16.msra.mxu0 %v459
  %627 = vmatprep.subr.bf16.mxu0 0
  %628 = vmatpush2.bf16.msra.mxu0 %v474
  %629 = vmatprep.subr.bf16.mxu0 0
  %630 = vmatpush2.bf16.msra.mxu0 %v473
  %631 = vmatprep.subr.bf16.mxu0 0
  %632 = vmatpush2.bf16.msra.mxu0 %v472
  %633 = vmatprep.subr.bf16.mxu0 0
  %634 = vmatpush2.bf16.msra.mxu0 %v471
  %635 = vmatprep.subr.bf16.mxu0 0
  %636 = vmatpush2.bf16.msra.mxu0 %v470
  %637 = vmatprep.subr.bf16.mxu0 0
  %638 = vmatpush2.bf16.msra.mxu0 %v469
  %639 = vmatprep.subr.bf16.mxu0 0
  %640 = vmatpush2.bf16.msra.mxu0 %v468
  %641 = vmatprep.subr.bf16.mxu0 0
  %642 = vmatpush2.bf16.msra.mxu0 %v467
  %643 = vmatprep.mubr.bf16.mxu0 %v47
  %644 = vmatmul.mubr.bf16.gmra.mxu0 %v46
  %v645 = vpop.f32.mrf.mxu0
  %v646 = vadd.f32 %v606, %v645
  %v647 = vpop.f32.mrf.mxu0
  %v648 = vpop.f32.mrf.mxu0
  %v649 = vpop.f32.mrf.mxu0
  %650 = vdwg.mxu0
  %651 = vmatprep.subr.bf16.mxu0 0
  %652 = vmatpush1.bf16.msra.mxu0 %v482
  %653 = vmatprep.subr.bf16.mxu0 0
  %654 = vmatpush1.bf16.msra.mxu0 %v481
  %655 = vmatprep.subr.bf16.mxu0 0
  %656 = vmatpush1.bf16.msra.mxu0 %v480
  %657 = vmatprep.subr.bf16.mxu0 0
  %658 = vmatpush1.bf16.msra.mxu0 %v479
  %659 = vmatprep.subr.bf16.mxu0 0
  %660 = vmatpush1.bf16.msra.mxu0 %v478
  %661 = vmatprep.subr.bf16.mxu0 0
  %662 = vmatpush1.bf16.msra.mxu0 %v477
  %663 = vmatprep.subr.bf16.mxu0 0
  %664 = vmatpush1.bf16.msra.mxu0 %v476
  %665 = vmatprep.subr.bf16.mxu0 0
  %666 = vmatpush1.bf16.msra.mxu0 %v475
  %667 = vmatprep.subr.bf16.mxu0 0
  %668 = vmatpush2.bf16.msra.mxu0 %v490
  %669 = vmatprep.subr.bf16.mxu0 0
  %670 = vmatpush2.bf16.msra.mxu0 %v489
  %671 = vmatprep.subr.bf16.mxu0 0
  %672 = vmatpush2.bf16.msra.mxu0 %v488
  %673 = vmatprep.subr.bf16.mxu0 0
  %674 = vmatpush2.bf16.msra.mxu0 %v487
  %675 = vmatprep.subr.bf16.mxu0 0
  %676 = vmatpush2.bf16.msra.mxu0 %v486
  %677 = vmatprep.subr.bf16.mxu0 0
  %678 = vmatpush2.bf16.msra.mxu0 %v485
  %679 = vmatprep.subr.bf16.mxu0 0
  %680 = vmatpush2.bf16.msra.mxu0 %v484
  %681 = vmatprep.subr.bf16.mxu0 0
  %682 = vmatpush2.bf16.msra.mxu0 %v483
  %683 = vmatprep.mubr.bf16.mxu0 %v49
  %684 = vmatmul.mubr.bf16.gmra.mxu0 %v48
  %v685 = vpop.f32.mrf.mxu0
  %v686 = vadd.f32 %v646, %v685
  %v687 = vpop.f32.mrf.mxu0
  %v688 = vpop.f32.mrf.mxu0
  %v689 = vpop.f32.mrf.mxu0
  %690 = vdwg.mxu0
  %691 = vmatprep.subr.bf16.mxu0 0
  %692 = vmatpush1.bf16.msra.mxu0 %v498
  %693 = vmatprep.subr.bf16.mxu0 0
  %694 = vmatpush1.bf16.msra.mxu0 %v497
  %695 = vmatprep.subr.bf16.mxu0 0
  %696 = vmatpush1.bf16.msra.mxu0 %v496
  %697 = vmatprep.subr.bf16.mxu0 0
  %698 = vmatpush1.bf16.msra.mxu0 %v495
  %699 = vmatprep.subr.bf16.mxu0 0
  %700 = vmatpush1.bf16.msra.mxu0 %v494
  %701 = vmatprep.subr.bf16.mxu0 0
  %702 = vmatpush1.bf16.msra.mxu0 %v493
  %703 = vmatprep.subr.bf16.mxu0 0
  %704 = vmatpush1.bf16.msra.mxu0 %v492
  %705 = vmatprep.subr.bf16.mxu0 0
  %706 = vmatpush1.bf16.msra.mxu0 %v491
  %707 = vmatprep.subr.bf16.mxu0 0
  %708 = vmatpush2.bf16.msra.mxu0 %v506
  %709 = vmatprep.subr.bf16.mxu0 0
  %710 = vmatpush2.bf16.msra.mxu0 %v505
  %711 = vmatprep.subr.bf16.mxu0 0
  %712 = vmatpush2.bf16.msra.mxu0 %v504
  %713 = vmatprep.subr.bf16.mxu0 0
  %714 = vmatpush2.bf16.msra.mxu0 %v503
  %715 = vmatprep.subr.bf16.mxu0 0
  %716 = vmatpush2.bf16.msra.mxu0 %v502
  %717 = vmatprep.subr.bf16.mxu0 0
  %718 = vmatpush2.bf16.msra.mxu0 %v501
  %719 = vmatprep.subr.bf16.mxu0 0
  %720 = vmatpush2.bf16.msra.mxu0 %v500
  %721 = vmatprep.subr.bf16.mxu0 0
  %722 = vmatpush2.bf16.msra.mxu0 %v499
  %723 = vmatprep.mubr.bf16.mxu0 %v51
  %724 = vmatmul.mubr.bf16.gmra.mxu0 %v50
  %v725 = vpop.f32.mrf.mxu0
  %v726 = vadd.f32 %v686, %v725
  %v727 = vpop.f32.mrf.mxu0
  %v728 = vpop.f32.mrf.mxu0
  %v729 = vpop.f32.mrf.mxu0
  %730 = vdwg.mxu0
  %v731 = vmax.f32 %v726, 0.0
  %v732 = vpack.c.bf16 %v731, %v731
  %v733 = vld [vmem:[%s4] sm:$0xff]
  %v734 = vld [vmem:[%s4 + $0x8] sm:$0xff]
  %v735 = vld [vmem:[%s4 + $0x10] sm:$0xff]
  %v736 = vld [vmem:[%s4 + $0x18] sm:$0xff]
  %v737 = vld [vmem:[%s5] sm:$0x3]
  %v739 = vlaneseq
  %v740 = vshrl.u32 %v739, 7
  %v741 = vsub.s32 0, %v740
  %v742 = vrot.slane %v737, %v741
  %v743 = vlaneseq
  %v744 = vshrl.u32 %v743, 7
  %v745 = vsub.s32 1, %v744
  %v746 = vrot.slane %v737, %v745
  %v753 = vunpack.c.l.b16 %v733
  %v754 = vunpack.c.h.b16 %v733
  %v755 = vunpack.c.l.b16 %v734
  %v756 = vunpack.c.h.b16 %v734
  %v757 = vunpack.c.l.b16 %v735
  %v758 = vunpack.c.h.b16 %v735
  %v759 = vunpack.c.l.b16 %v736
  %v760 = vunpack.c.h.b16 %v736
  %v761 = vpack.c.b16 %v755, %v753
  %v762 = vpack.c.b16 %v756, %v754
  %v763 = vpack.c.b16 %v759, %v757
  %v764 = vpack.c.b16 %v760, %v758
  %vm769 = vcmask 261120
  %v771 = vsel %vm769, %v732, 0
  %773 = vmatprep.subr.bf16.mxu0 0
  %774 = vmatpush1.bf16.msra.mxu0 0
  %775 = vmatprep.subr.bf16.mxu0 0
  %776 = vmatpush1.bf16.msra.mxu0 0
  %777 = vmatprep.subr.bf16.mxu0 0
  %778 = vmatpush1.bf16.msra.mxu0 0
  %779 = vmatprep.subr.bf16.mxu0 0
  %780 = vmatpush1.bf16.msra.mxu0 0
  %781 = vmatprep.subr.bf16.mxu0 0
  %782 = vmatpush1.bf16.msra.mxu0 0
  %783 = vmatprep.subr.bf16.mxu0 0
  %784 = vmatpush1.bf16.msra.mxu0 0
  %785 = vmatprep.subr.bf16.mxu0 %v764
  %786 = vmatpush1.bf16.msra.mxu0 %v763
  %787 = vmatprep.subr.bf16.mxu0 %v762
  %788 = vmatpush1.bf16.msra.mxu0 %v761
  %789 = vmatprep.subr.bf16.mxu0 0
  %790 = vmatpush2.bf16.msra.mxu0 0
  %791 = vmatprep.subr.bf16.mxu0 0
  %792 = vmatpush2.bf16.msra.mxu0 0
  %793 = vmatprep.subr.bf16.mxu0 0
  %794 = vmatpush2.bf16.msra.mxu0 0
  %795 = vmatprep.subr.bf16.mxu0 0
  %796 = vmatpush2.bf16.msra.mxu0 0
  %797 = vmatprep.subr.bf16.mxu0 0
  %798 = vmatpush2.bf16.msra.mxu0 0
  %799 = vmatprep.subr.bf16.mxu0 0
  %800 = vmatpush2.bf16.msra.mxu0 0
  %801 = vmatprep.subr.bf16.mxu0 0
  %802 = vmatpush2.bf16.msra.mxu0 0
  %803 = vmatprep.subr.bf16.mxu0 0
  %804 = vmatpush2.bf16.msra.mxu0 0
  %805 = vmatprep.mubr.bf16.mxu0 0
  %806 = vmatmul.mubr.bf16.gmra.mxu0 %v771
  %v807 = vpop.f32.mrf.mxu0
  %v808 = vadd.f32 %v742, %v807
  %v809 = vpop.f32.mrf.mxu0
  %v810 = vadd.f32 %v746, %v809
  %v811 = vpop.f32.mrf.mxu0
  %v812 = vpop.f32.mrf.mxu0
  %813 = vdwg.mxu0
  %v814 = vld [vmem:[%s1] sm:$0xff]
  %v815 = vmul.f32 %v810, 1.442695
  %v816 = vpow.pop %v815
  %817 = vst [vmem:[#allocation2] sm:$0xff] %v808
  %v818 = vmul.f32 %v816, %v814
  %v819 = vadd.f32 %v808, %v818
  %vm820 = vcmask 130048
  %821 = vst.msk [vmem:[#allocation2] sm:$0xff] %vm820, %v819
  %v822 = vld [vmem:[#allocation2] sm:$0xff]
  %v823 = vpack.c.bf16 %v822, %v822
  %v824 = vld [vmem:[%s6] sm:$0xf]
  %v825 = vld [vmem:[%s6 + $0x4] sm:$0xf]
  %v826 = vld [vmem:[%s6 + $0x8] sm:$0xf]
  %v827 = vld [vmem:[%s6 + $0xc] sm:$0xf]
  %v828 = vld [vmem:[%s6 + $0x10] sm:$0xf]
  %v829 = vld [vmem:[%s6 + $0x14] sm:$0xf]
  %v830 = vld [vmem:[%s6 + $0x18] sm:$0xf]
  %v831 = vld [vmem:[%s6 + $0x1c] sm:$0xf]
  %v832 = vld [vmem:[%s6 + $0x20] sm:$0xf]
  %v833 = vld [vmem:[%s6 + $0x24] sm:$0xf]
  %v834 = vld [vmem:[%s6 + $0x28] sm:$0xf]
  %v835 = vld [vmem:[%s6 + $0x2c] sm:$0xf]
  %v836 = vld [vmem:[%s6 + $0x30] sm:$0xf]
  %v837 = vld [vmem:[%s6 + $0x34] sm:$0xf]
  %v838 = vld [vmem:[%s6 + $0x38] sm:$0xf]
  %v839 = vld [vmem:[%s6 + $0x3c] sm:$0xf]
  %v840 = vld [vmem:[%s7] sm:$0x1]
  %v842 = vlaneseq
  %v843 = vshrl.u32 %v842, 7
  %v844 = vsub.s32 0, %v843
  %v845 = vrot.slane %v840, %v844
  %v863 = vunpack.c.l.b16 %v824
  %v864 = vunpack.c.l.b16 %v825
  %v865 = vunpack.c.l.b16 %v826
  %v866 = vunpack.c.l.b16 %v827
  %v867 = vunpack.c.l.b16 %v828
  %v868 = vunpack.c.l.b16 %v829
  %v869 = vunpack.c.l.b16 %v830
  %v870 = vunpack.c.l.b16 %v831
  %v871 = vunpack.c.l.b16 %v832
  %v872 = vunpack.c.l.b16 %v833
  %v873 = vunpack.c.l.b16 %v834
  %v874 = vunpack.c.l.b16 %v835
  %v875 = vunpack.c.l.b16 %v836
  %v876 = vunpack.c.l.b16 %v837
  %v877 = vunpack.c.l.b16 %v838
  %v878 = vunpack.c.l.b16 %v839
  %v879 = vpack.c.b16 %v864, %v863
  %v880 = vpack.c.b16 %v866, %v865
  %v881 = vpack.c.b16 %v868, %v867
  %v882 = vpack.c.b16 %v870, %v869
  %v883 = vpack.c.b16 %v872, %v871
  %v884 = vpack.c.b16 %v874, %v873
  %v885 = vpack.c.b16 %v876, %v875
  %v886 = vpack.c.b16 %v878, %v877
  %895 = vmatprep.subr.bf16.mxu0 0
  %896 = vmatpush1.bf16.msra.mxu0 %v886
  %897 = vmatprep.subr.bf16.mxu0 0
  %898 = vmatpush1.bf16.msra.mxu0 %v885
  %899 = vmatprep.subr.bf16.mxu0 0
  %900 = vmatpush1.bf16.msra.mxu0 %v884
  %901 = vmatprep.subr.bf16.mxu0 0
  %902 = vmatpush1.bf16.msra.mxu0 %v883
  %903 = vmatprep.subr.bf16.mxu0 0
  %904 = vmatpush1.bf16.msra.mxu0 %v882
  %905 = vmatprep.subr.bf16.mxu0 0
  %906 = vmatpush1.bf16.msra.mxu0 %v881
  %907 = vmatprep.subr.bf16.mxu0 0
  %908 = vmatpush1.bf16.msra.mxu0 %v880
  %909 = vmatprep.subr.bf16.mxu0 0
  %910 = vmatpush1.bf16.msra.mxu0 %v879
  %911 = vmatprep.subr.bf16.mxu0 0
  %912 = vmatpush2.bf16.msra.mxu0 0
  %913 = vmatprep.subr.bf16.mxu0 0
  %914 = vmatpush2.bf16.msra.mxu0 0
  %915 = vmatprep.subr.bf16.mxu0 0
  %916 = vmatpush2.bf16.msra.mxu0 0
  %917 = vmatprep.subr.bf16.mxu0 0
  %918 = vmatpush2.bf16.msra.mxu0 0
  %919 = vmatprep.subr.bf16.mxu0 0
  %920 = vmatpush2.bf16.msra.mxu0 0
  %921 = vmatprep.subr.bf16.mxu0 0
  %922 = vmatpush2.bf16.msra.mxu0 0
  %923 = vmatprep.subr.bf16.mxu0 0
  %924 = vmatpush2.bf16.msra.mxu0 0
  %925 = vmatprep.subr.bf16.mxu0 0
  %926 = vmatpush2.bf16.msra.mxu0 0
  %927 = vmatprep.mubr.bf16.mxu0 0
  %928 = vmatmul.mubr.bf16.gmra.mxu0 %v823
  %v929 = vpop.f32.mrf.mxu0
  %v930 = vadd.f32 %v845, %v929
  %v931 = vpop.f32.mrf.mxu0
  %v932 = vpop.f32.mrf.mxu0
  %v933 = vpop.f32.mrf.mxu0
  %934 = vdwg.mxu0
  %v935 = vmax.f32 %v930, 0.0
  %v936 = vpack.c.bf16 %v935, %v935
  %v937 = vld [vmem:[%s8] sm:$0xff]
  %v938 = vld [vmem:[%s8 + $0x8] sm:$0xff]
  %v939 = vld [vmem:[%s8 + $0x10] sm:$0xff]
  %v940 = vld [vmem:[%s8 + $0x18] sm:$0xff]
  %v941 = vld [vmem:[%s8 + $0x20] sm:$0xff]
  %v942 = vld [vmem:[%s8 + $0x28] sm:$0xff]
  %v943 = vld [vmem:[%s8 + $0x30] sm:$0xff]
  %v944 = vld [vmem:[%s8 + $0x38] sm:$0xff]
  %v945 = vld [vmem:[%s8 + $0x40] sm:$0xff]
  %v946 = vld [vmem:[%s8 + $0x48] sm:$0xff]
  %v947 = vld [vmem:[%s8 + $0x50] sm:$0xff]
  %v948 = vld [vmem:[%s8 + $0x58] sm:$0xff]
  %v949 = vld [vmem:[%s8 + $0x60] sm:$0xff]
  %v950 = vld [vmem:[%s8 + $0x68] sm:$0xff]
  %v951 = vld [vmem:[%s8 + $0x70] sm:$0xff]
  %v952 = vld [vmem:[%s8 + $0x78] sm:$0xff]
  %v953 = vld [vmem:[%s9] sm:$0xff]
  %v955 = vlaneseq
  %v956 = vshrl.u32 %v955, 7
  %v957 = vsub.s32 0, %v956
  %v958 = vrot.slane %v953, %v957
  %v959 = vlaneseq
  %v960 = vshrl.u32 %v959, 7
  %v961 = vsub.s32 1, %v960
  %v962 = vrot.slane %v953, %v961
  %v963 = vlaneseq
  %v964 = vshrl.u32 %v963, 7
  %v965 = vsub.s32 2, %v964
  %v966 = vrot.slane %v953, %v965
  %v967 = vlaneseq
  %v968 = vshrl.u32 %v967, 7
  %v969 = vsub.s32 3, %v968
  %v970 = vrot.slane %v953, %v969
  %v971 = vlaneseq
  %v972 = vshrl.u32 %v971, 7
  %v973 = vsub.s32 4, %v972
  %v974 = vrot.slane %v953, %v973
  %v975 = vlaneseq
  %v976 = vshrl.u32 %v975, 7
  %v977 = vsub.s32 5, %v976
  %v978 = vrot.slane %v953, %v977
  %v979 = vlaneseq
  %v980 = vshrl.u32 %v979, 7
  %v981 = vsub.s32 6, %v980
  %v982 = vrot.slane %v953, %v981
  %v983 = vlaneseq
  %v984 = vshrl.u32 %v983, 7
  %v985 = vsub.s32 7, %v984
  %v986 = vrot.slane %v953, %v985
  %v1011 = vunpack.c.l.b16 %v937
  %v1012 = vunpack.c.h.b16 %v937
  %v1013 = vunpack.c.l.b16 %v938
  %v1014 = vunpack.c.h.b16 %v938
  %v1015 = vunpack.c.l.b16 %v939
  %v1016 = vunpack.c.h.b16 %v939
  %v1017 = vunpack.c.l.b16 %v940
  %v1018 = vunpack.c.h.b16 %v940
  %v1019 = vunpack.c.l.b16 %v941
  %v1020 = vunpack.c.h.b16 %v941
  %v1021 = vunpack.c.l.b16 %v942
  %v1022 = vunpack.c.h.b16 %v942
  %v1023 = vunpack.c.l.b16 %v943
  %v1024 = vunpack.c.h.b16 %v943
  %v1025 = vunpack.c.l.b16 %v944
  %v1026 = vunpack.c.h.b16 %v944
  %v1027 = vunpack.c.l.b16 %v945
  %v1028 = vunpack.c.h.b16 %v945
  %v1029 = vunpack.c.l.b16 %v946
  %v1030 = vunpack.c.h.b16 %v946
  %v1031 = vunpack.c.l.b16 %v947
  %v1032 = vunpack.c.h.b16 %v947
  %v1033 = vunpack.c.l.b16 %v948
  %v1034 = vunpack.c.h.b16 %v948
  %v1035 = vunpack.c.l.b16 %v949
  %v1036 = vunpack.c.h.b16 %v949
  %v1037 = vunpack.c.l.b16 %v950
  %v1038 = vunpack.c.h.b16 %v950
  %v1039 = vunpack.c.l.b16 %v951
  %v1040 = vunpack.c.h.b16 %v951
  %v1041 = vunpack.c.l.b16 %v952
  %v1042 = vunpack.c.h.b16 %v952
  %v1043 = vpack.c.b16 %v1019, %v1011
  %v1044 = vpack.c.b16 %v1020, %v1012
  %v1045 = vpack.c.b16 %v1021, %v1013
  %v1046 = vpack.c.b16 %v1022, %v1014
  %v1047 = vpack.c.b16 %v1023, %v1015
  %v1048 = vpack.c.b16 %v1024, %v1016
  %v1049 = vpack.c.b16 %v1025, %v1017
  %v1050 = vpack.c.b16 %v1026, %v1018
  %v1051 = vpack.c.b16 %v1035, %v1027
  %v1052 = vpack.c.b16 %v1036, %v1028
  %v1053 = vpack.c.b16 %v1037, %v1029
  %v1054 = vpack.c.b16 %v1038, %v1030
  %v1055 = vpack.c.b16 %v1039, %v1031
  %v1056 = vpack.c.b16 %v1040, %v1032
  %v1057 = vpack.c.b16 %v1041, %v1033
  %v1058 = vpack.c.b16 %v1042, %v1034
  %v1076 = vsel %vm769, %v936, 0
  %1078 = vmatprep.subr.bf16.mxu0 0
  %1079 = vmatpush1.bf16.msra.mxu0 0
  %1080 = vmatprep.subr.bf16.mxu0 0
  %1081 = vmatpush1.bf16.msra.mxu0 0
  %1082 = vmatprep.subr.bf16.mxu0 0
  %1083 = vmatpush1.bf16.msra.mxu0 0
  %1084 = vmatprep.subr.bf16.mxu0 0
  %1085 = vmatpush1.bf16.msra.mxu0 0
  %1086 = vmatprep.subr.bf16.mxu0 0
  %1087 = vmatpush1.bf16.msra.mxu0 0
  %1088 = vmatprep.subr.bf16.mxu0 0
  %1089 = vmatpush1.bf16.msra.mxu0 0
  %1090 = vmatprep.subr.bf16.mxu0 %v1052
  %1091 = vmatpush1.bf16.msra.mxu0 %v1051
  %1092 = vmatprep.subr.bf16.mxu0 %v1044
  %1093 = vmatpush1.bf16.msra.mxu0 %v1043
  %1094 = vmatprep.subr.bf16.mxu0 0
  %1095 = vmatpush2.bf16.msra.mxu0 0
  %1096 = vmatprep.subr.bf16.mxu0 0
  %1097 = vmatpush2.bf16.msra.mxu0 0
  %1098 = vmatprep.subr.bf16.mxu0 0
  %1099 = vmatpush2.bf16.msra.mxu0 0
  %1100 = vmatprep.subr.bf16.mxu0 0
  %1101 = vmatpush2.bf16.msra.mxu0 0
  %1102 = vmatprep.subr.bf16.mxu0 0
  %1103 = vmatpush2.bf16.msra.mxu0 0
  %1104 = vmatprep.subr.bf16.mxu0 0
  %1105 = vmatpush2.bf16.msra.mxu0 0
  %1106 = vmatprep.subr.bf16.mxu0 0
  %1107 = vmatpush2.bf16.msra.mxu0 0
  %1108 = vmatprep.subr.bf16.mxu0 0
  %1109 = vmatpush2.bf16.msra.mxu0 0
  %1110 = vmatprep.mubr.bf16.mxu0 0
  %1111 = vmatmul.mubr.bf16.gmra.mxu0 %v1076
  %v1112 = vpop.f32.mrf.mxu0
  %v1113 = vadd.f32 %v958, %v1112
  %v1114 = vpop.f32.mrf.mxu0
  %v1115 = vadd.f32 %v962, %v1114
  %v1116 = vpop.f32.mrf.mxu0
  %v1117 = vpop.f32.mrf.mxu0
  %1118 = vdwg.mxu0
  %1119 = vmatprep.subr.bf16.mxu0 0
  %1120 = vmatpush1.bf16.msra.mxu0 0
  %1121 = vmatprep.subr.bf16.mxu0 0
  %1122 = vmatpush1.bf16.msra.mxu0 0
  %1123 = vmatprep.subr.bf16.mxu0 0
  %1124 = vmatpush1.bf16.msra.mxu0 0
  %1125 = vmatprep.subr.bf16.mxu0 0
  %1126 = vmatpush1.bf16.msra.mxu0 0
  %1127 = vmatprep.subr.bf16.mxu0 0
  %1128 = vmatpush1.bf16.msra.mxu0 0
  %1129 = vmatprep.subr.bf16.mxu0 0
  %1130 = vmatpush1.bf16.msra.mxu0 0
  %1131 = vmatprep.subr.bf16.mxu0 %v1054
  %1132 = vmatpush1.bf16.msra.mxu0 %v1053
  %1133 = vmatprep.subr.bf16.mxu0 %v1046
  %1134 = vmatpush1.bf16.msra.mxu0 %v1045
  %1135 = vmatprep.subr.bf16.mxu0 0
  %1136 = vmatpush2.bf16.msra.mxu0 0
  %1137 = vmatprep.subr.bf16.mxu0 0
  %1138 = vmatpush2.bf16.msra.mxu0 0
  %1139 = vmatprep.subr.bf16.mxu0 0
  %1140 = vmatpush2.bf16.msra.mxu0 0
  %1141 = vmatprep.subr.bf16.mxu0 0
  %1142 = vmatpush2.bf16.msra.mxu0 0
  %1143 = vmatprep.subr.bf16.mxu0 0
  %1144 = vmatpush2.bf16.msra.mxu0 0
  %1145 = vmatprep.subr.bf16.mxu0 0
  %1146 = vmatpush2.bf16.msra.mxu0 0
  %1147 = vmatprep.subr.bf16.mxu0 0
  %1148 = vmatpush2.bf16.msra.mxu0 0
  %1149 = vmatprep.subr.bf16.mxu0 0
  %1150 = vmatpush2.bf16.msra.mxu0 0
  %1151 = vmatprep.mubr.bf16.mxu0 0
  %1152 = vmatmul.mubr.bf16.gmra.mxu0 %v1076
  %v1153 = vpop.f32.mrf.mxu0
  %v1154 = vadd.f32 %v966, %v1153
  %v1155 = vpop.f32.mrf.mxu0
  %v1156 = vadd.f32 %v970, %v1155
  %v1157 = vpop.f32.mrf.mxu0
  %v1158 = vpop.f32.mrf.mxu0
  %1159 = vdwg.mxu0
  %1160 = vmatprep.subr.bf16.mxu0 0
  %1161 = vmatpush1.bf16.msra.mxu0 0
  %1162 = vmatprep.subr.bf16.mxu0 0
  %1163 = vmatpush1.bf16.msra.mxu0 0
  %1164 = vmatprep.subr.bf16.mxu0 0
  %1165 = vmatpush1.bf16.msra.mxu0 0
  %1166 = vmatprep.subr.bf16.mxu0 0
  %1167 = vmatpush1.bf16.msra.mxu0 0
  %1168 = vmatprep.subr.bf16.mxu0 0
  %1169 = vmatpush1.bf16.msra.mxu0 0
  %1170 = vmatprep.subr.bf16.mxu0 0
  %1171 = vmatpush1.bf16.msra.mxu0 0
  %1172 = vmatprep.subr.bf16.mxu0 %v1056
  %1173 = vmatpush1.bf16.msra.mxu0 %v1055
  %1174 = vmatprep.subr.bf16.mxu0 %v1048
  %1175 = vmatpush1.bf16.msra.mxu0 %v1047
  %1176 = vmatprep.subr.bf16.mxu0 0
  %1177 = vmatpush2.bf16.msra.mxu0 0
  %1178 = vmatprep.subr.bf16.mxu0 0
  %1179 = vmatpush2.bf16.msra.mxu0 0
  %1180 = vmatprep.subr.bf16.mxu0 0
  %1181 = vmatpush2.bf16.msra.mxu0 0
  %1182 = vmatprep.subr.bf16.mxu0 0
  %1183 = vmatpush2.bf16.msra.mxu0 0
  %1184 = vmatprep.subr.bf16.mxu0 0
  %1185 = vmatpush2.bf16.msra.mxu0 0
  %1186 = vmatprep.subr.bf16.mxu0 0
  %1187 = vmatpush2.bf16.msra.mxu0 0
  %1188 = vmatprep.subr.bf16.mxu0 0
  %1189 = vmatpush2.bf16.msra.mxu0 0
  %1190 = vmatprep.subr.bf16.mxu0 0
  %1191 = vmatpush2.bf16.msra.mxu0 0
  %1192 = vmatprep.mubr.bf16.mxu0 0
  %1193 = vmatmul.mubr.bf16.gmra.mxu0 %v1076
  %v1194 = vpop.f32.mrf.mxu0
  %v1195 = vadd.f32 %v974, %v1194
  %v1196 = vpop.f32.mrf.mxu0
  %v1197 = vadd.f32 %v978, %v1196
  %v1198 = vpop.f32.mrf.mxu0
  %v1199 = vpop.f32.mrf.mxu0
  %1200 = vdwg.mxu0
  %1201 = vmatprep.subr.bf16.mxu0 0
  %1202 = vmatpush1.bf16.msra.mxu0 0
  %1203 = vmatprep.subr.bf16.mxu0 0
  %1204 = vmatpush1.bf16.msra.mxu0 0
  %1205 = vmatprep.subr.bf16.mxu0 0
  %1206 = vmatpush1.bf16.msra.mxu0 0
  %1207 = vmatprep.subr.bf16.mxu0 0
  %1208 = vmatpush1.bf16.msra.mxu0 0
  %1209 = vmatprep.subr.bf16.mxu0 0
  %1210 = vmatpush1.bf16.msra.mxu0 0
  %1211 = vmatprep.subr.bf16.mxu0 0
  %1212 = vmatpush1.bf16.msra.mxu0 0
  %1213 = vmatprep.subr.bf16.mxu0 %v1058
  %1214 = vmatpush1.bf16.msra.mxu0 %v1057
  %1215 = vmatprep.subr.bf16.mxu0 %v1050
  %1216 = vmatpush1.bf16.msra.mxu0 %v1049
  %1217 = vmatprep.subr.bf16.mxu0 0
  %1218 = vmatpush2.bf16.msra.mxu0 0
  %1219 = vmatprep.subr.bf16.mxu0 0
  %1220 = vmatpush2.bf16.msra.mxu0 0
  %1221 = vmatprep.subr.bf16.mxu0 0
  %1222 = vmatpush2.bf16.msra.mxu0 0
  %1223 = vmatprep.subr.bf16.mxu0 0
  %1224 = vmatpush2.bf16.msra.mxu0 0
  %1225 = vmatprep.subr.bf16.mxu0 0
  %1226 = vmatpush2.bf16.msra.mxu0 0
  %1227 = vmatprep.subr.bf16.mxu0 0
  %1228 = vmatpush2.bf16.msra.mxu0 0
  %1229 = vmatprep.subr.bf16.mxu0 0
  %1230 = vmatpush2.bf16.msra.mxu0 0
  %1231 = vmatprep.subr.bf16.mxu0 0
  %1232 = vmatpush2.bf16.msra.mxu0 0
  %1233 = vmatprep.mubr.bf16.mxu0 0
  %1234 = vmatmul.mubr.bf16.gmra.mxu0 %v1076
  %v1235 = vpop.f32.mrf.mxu0
  %v1236 = vadd.f32 %v982, %v1235
  %v1237 = vpop.f32.mrf.mxu0
  %v1238 = vadd.f32 %v986, %v1237
  %v1239 = vpop.f32.mrf.mxu0
  %v1240 = vpop.f32.mrf.mxu0
  %1241 = vdwg.mxu0
  %v1242 = vxor.u32 %v1113, 2147483648
  %v1243 = vxor.u32 %v1115, 2147483648
  %v1244 = vxor.u32 %v1154, 2147483648
  %v1245 = vxor.u32 %v1156, 2147483648
  %v1246 = vxor.u32 %v1195, 2147483648
  %v1247 = vxor.u32 %v1197, 2147483648
  %v1248 = vxor.u32 %v1236, 2147483648
  %v1249 = vxor.u32 %v1238, 2147483648
  %v1250 = vmul.f32 %v1242, 1.442695
  %v1251 = vpow.pop %v1250
  %v1252 = vmul.f32 %v1243, 1.442695
  %v1253 = vpow.pop %v1252
  %v1254 = vmul.f32 %v1244, 1.442695
  %v1255 = vpow.pop %v1254
  %v1256 = vmul.f32 %v1245, 1.442695
  %v1257 = vpow.pop %v1256
  %v1258 = vmul.f32 %v1246, 1.442695
  %v1259 = vpow.pop %v1258
  %v1260 = vmul.f32 %v1247, 1.442695
  %v1261 = vpow.pop %v1260
  %v1262 = vmul.f32 %v1248, 1.442695
  %v1263 = vpow.pop %v1262
  %v1264 = vmul.f32 %v1249, 1.442695
  %v1265 = vpow.pop %v1264
  %v1266 = vadd.f32 %v1251, 1.0
  %v1267 = vadd.f32 %v1253, 1.0
  %v1268 = vadd.f32 %v1255, 1.0
  %v1269 = vadd.f32 %v1257, 1.0
  %v1270 = vadd.f32 %v1259, 1.0
  %v1271 = vadd.f32 %v1261, 1.0
  %v1272 = vadd.f32 %v1263, 1.0
  %v1273 = vadd.f32 %v1265, 1.0
  %v1274 = vrcp.pop %v1266
  %v1275 = vmul.f32 1.0, %v1274
  %v1276 = vrcp.pop %v1267
  %v1277 = vmul.f32 1.0, %v1276
  %v1278 = vrcp.pop %v1268
  %v1279 = vmul.f32 1.0, %v1278
  %v1280 = vrcp.pop %v1269
  %v1281 = vmul.f32 1.0, %v1280
  %v1282 = vrcp.pop %v1270
  %v1283 = vmul.f32 1.0, %v1282
  %v1284 = vrcp.pop %v1271
  %v1285 = vmul.f32 1.0, %v1284
  %v1286 = vrcp.pop %v1272
  %v1287 = vmul.f32 1.0, %v1286
  %v1288 = vrcp.pop %v1273
  %v1289 = vmul.f32 1.0, %v1288
  %1290 = vst [vmem:[%s10] sm:$0xff] %v1275
  %1291 = vst [vmem:[%s10 + $0x8] sm:$0xff] %v1277
  %1292 = vst [vmem:[%s10 + $0x10] sm:$0xff] %v1279
  %1293 = vst [vmem:[%s10 + $0x18] sm:$0xff] %v1281
  %1294 = vst [vmem:[%s10 + $0x20] sm:$0xff] %v1283
  %1295 = vst [vmem:[%s10 + $0x28] sm:$0xff] %v1285
  %1296 = vst [vmem:[%s10 + $0x30] sm:$0xff] %v1287
  %1297 = vst [vmem:[%s10 + $0x38] sm:$0xff] %v1289
  // Predicated region
  $region42: #{_vae_forward_impl.1} parent=0 // pred_check
    _
  $region43: #{_vae_forward_impl.1} parent=0 // pred_check_branch
    %1299 = sbr.rel (0) target = $region45
  $region44: #{_vae_forward_impl.1} parent=0 // pred_region
    _
  $region45: #{_vae_forward_impl.1} parent=0 // pred_fallthru
    _
  // Predicated region
  $region46: #{_vae_forward_impl.1} parent=0 // pred_check
    _
  $region47: #{_vae_forward_impl.1} parent=0 // pred_check_branch
    %1301 = sbr.rel (0) target = $region49
  $region48: #{_vae_forward_impl.1} parent=0 // pred_region
    _
  $region49: #{_vae_forward_impl.1} parent=0 // pred_fallthru
    _

</llo_original>
